<compile_context>
chip_gen: v7x
topology: tpu7x:2x2x1
jax: 0.10.0
libtpu: 0.0.40
codegen_flags: <defaults>
</compile_context>

<pallas_src>
import functools

import jax
import jax.numpy as jnp
from jax.experimental import pallas as pl
from jax.experimental.pallas import tpu as pltpu


_VMEM_LIMIT = 48 << 20   # safe headroom on v7x (64 MiB) as well as v5e/v6e


def _round_up(x, m):
    return (x + m - 1) // m * m


# ------------------------------ in-kernel helpers --------------------------- #

def _zero_halo(xpad_ref, pad, hw):
    """Zero only the two lane halo strips (interior is overwritten per conv)."""
    cin, total = xpad_ref.shape
    xpad_ref[:, :pad] = jnp.zeros((cin, pad), xpad_ref.dtype)
    xpad_ref[:, pad + hw:] = jnp.zeros((cin, total - pad - hw), xpad_ref.dtype)


def _conv3x3_cm(x_val, w, b, xpad_ref, cols_ref, *, H, W, pad):
    """3x3 SAME conv in channel-major layout: returns (Cout, H*W) f32.

    x_val    : (Cin, H*W) float value         -- channel-major feature map
    w        : (Cout, 9*Cin) bf16 value       -- taps flattened row-major (ky,kx,ci)
    b        : (Cout, 1) f32 value
    xpad_ref : (Cin, pad + H*W + pad) bf16 scratch; halo strips pre-zeroed
    cols_ref : (9*Cin, H*W) bf16 scratch      -- im2col slab
    """
    hw = H * W
    cin = x_val.shape[0]

    # Lane-aligned interior store (pad is a multiple of 128).
    xpad_ref[:, pad:pad + hw] = x_val.astype(xpad_ref.dtype)

    # Image-column index of every lane, for left/right edge masking.
    col_w = jax.lax.broadcasted_iota(jnp.int32, (cin, hw), 1) % W
    left_edge = col_w == 0            # dx = -1 invalid at w == 0
    right_edge = col_w == W - 1       # dx = +1 invalid at w == W-1

    for k in range(9):
        dy, dx = k // 3 - 1, k % 3 - 1
        shift = dy * W + dx
        v = xpad_ref[:, pad + shift: pad + shift + hw]   # lane-shifted tap
        if dx == -1:
            v = jnp.where(left_edge, jnp.zeros_like(v), v)
        elif dx == 1:
            v = jnp.where(right_edge, jnp.zeros_like(v), v)
        # Full-lane store; sublane offset k*cin is a multiple of 8.
        cols_ref[k * cin:(k + 1) * cin, :] = v

    acc = jnp.dot(w, cols_ref[...], preferred_element_type=jnp.float32)
    return acc + b                                        # (Cout,1) lane broadcast


def _first_conv_kernel(x_ref, w_ref, b_ref, o_ref, xpad_ref, cols_ref,
                       *, H, W, pad):
    """Conv3x3(Cin_p -> Cout) + bias + LeakyReLU(0.1) for one batch element."""
    hw = H * W
    _zero_halo(xpad_ref, pad, hw)
    acc = _conv3x3_cm(x_ref[...], w_ref[...], b_ref[...], xpad_ref, cols_ref,
                      H=H, W=W, pad=pad)
    o_ref[...] = jnp.where(acc >= 0, acc, 0.1 * acc)      # LeakyReLU(0.1), f32


def _res_chain_kernel(fea_ref, w1_ref, b1_ref, w2_ref, b2_ref, o_ref,
                      fea_sc, xpad_ref, cols_ref, *, H, W, pad):
    """Fused chain of ResidualBlockNoBN; grid axis 1 walks the blocks."""
    hw = H * W
    j = pl.program_id(1)

    @pl.when(j == 0)
    def _():
        fea_sc[...] = fea_ref[...]        # seed f32 carry; resident across blocks

    _zero_halo(xpad_ref, pad, hw)

    x = fea_sc[...]                                            # (C, H*W) f32
    t = _conv3x3_cm(x, w1_ref[...], b1_ref[...], xpad_ref, cols_ref,
                    H=H, W=W, pad=pad)
    t = jnp.maximum(t, 0.0)                                    # ReLU
    y = _conv3x3_cm(t, w2_ref[...], b2_ref[...], xpad_ref, cols_ref,
                    H=H, W=W, pad=pad)
    fea_sc[...] = x + y                                        # residual, f32

    @pl.when(j == pl.num_programs(1) - 1)
    def _():
        o_ref[...] = fea_sc[...]          # single lane-dense writeback per item


# ------------------------------ pallas wrappers ------------------------------ #

def _first_conv(x_cm, w_pk, b_pk, *, H, W):
    """x_cm: (N, Cin_p, H*W) f32. w_pk: (Cout, 9*Cin_p) bf16. b_pk: (Cout,1) f32."""
    N, cin_p, hw = x_cm.shape
    cout = w_pk.shape[0]
    pad = _round_up(W + 1, 128)

    flops = 2 * N * hw * 9 * cin_p * cout
    bytes_accessed = (x_cm.size + N * cout * hw + b_pk.size) * 4 + w_pk.size * 2

    kernel = functools.partial(_first_conv_kernel, H=H, W=W, pad=pad)
    return pl.pallas_call(
        kernel,
        out_shape=jax.ShapeDtypeStruct((N, cout, hw), jnp.float32),
        grid=(N,),
        in_specs=[
            pl.BlockSpec((None, cin_p, hw), lambda n: (n, 0, 0)),
            pl.BlockSpec((cout, 9 * cin_p), lambda n: (0, 0)),
            pl.BlockSpec((cout, 1), lambda n: (0, 0)),
        ],
        out_specs=pl.BlockSpec((None, cout, hw), lambda n: (n, 0, 0)),
        scratch_shapes=[
            pltpu.VMEM((cin_p, 2 * pad + hw), jnp.bfloat16),   # flat halo scratch
            pltpu.VMEM((9 * cin_p, hw), jnp.bfloat16),         # im2col slab
        ],
        compiler_params=pltpu.CompilerParams(
            dimension_semantics=("parallel",),
            vmem_limit_bytes=_VMEM_LIMIT),
        cost_estimate=pl.CostEstimate(flops=int(flops), transcendentals=0,
                                      bytes_accessed=int(bytes_accessed)),
    )(x_cm, w_pk, b_pk)


def _res_chain(fea_cm, w1s, b1s, w2s, b2s, *, H, W):
    """fea_cm: (N, C, H*W) f32. w1s/w2s: (nb, C, 9C) bf16. b1s/b2s: (nb, C, 1) f32."""
    N, C, hw = fea_cm.shape
    nb = w1s.shape[0]
    pad = _round_up(W + 1, 128)

    flops = 2 * 2 * N * nb * hw * 9 * C * C
    bytes_accessed = (2 * fea_cm.size + b1s.size + b2s.size) * 4 \
        + (w1s.size + w2s.size) * 2

    kernel = functools.partial(_res_chain_kernel, H=H, W=W, pad=pad)
    return pl.pallas_call(
        kernel,
        out_shape=jax.ShapeDtypeStruct((N, C, hw), jnp.float32),
        grid=(N, nb),
        in_specs=[
            pl.BlockSpec((None, C, hw), lambda n, j: (n, 0, 0)),
            pl.BlockSpec((None, C, 9 * C), lambda n, j: (j, 0, 0)),
            pl.BlockSpec((None, C, 1), lambda n, j: (j, 0, 0)),
            pl.BlockSpec((None, C, 9 * C), lambda n, j: (j, 0, 0)),
            pl.BlockSpec((None, C, 1), lambda n, j: (j, 0, 0)),
        ],
        out_specs=pl.BlockSpec((None, C, hw), lambda n, j: (n, 0, 0)),
        scratch_shapes=[
            pltpu.VMEM((C, hw), jnp.float32),                  # f32 fea carry
            pltpu.VMEM((C, 2 * pad + hw), jnp.bfloat16),       # flat halo scratch
            pltpu.VMEM((9 * C, hw), jnp.bfloat16),             # im2col slab
        ],
        compiler_params=pltpu.CompilerParams(
            dimension_semantics=("parallel", "arbitrary"),
            vmem_limit_bytes=_VMEM_LIMIT),
        cost_estimate=pl.CostEstimate(flops=int(flops), transcendentals=0,
                                      bytes_accessed=int(bytes_accessed)),
    )(fea_cm, w1s, b1s, w2s, b2s)


# ------------------------------- module forward ------------------------------ #

def _pack_conv_w(w_hwio, cin_pad=None):
    """(3,3,Cin,Cout) HWIO -> (Cout, 9*Cin_pad) bf16, taps (ky,kx,ci) row-major."""
    kh, kw, cin, cout = w_hwio.shape
    if cin_pad is not None and cin_pad > cin:
        w_hwio = jnp.pad(w_hwio, ((0, 0), (0, 0), (0, cin_pad - cin), (0, 0)))
        cin = cin_pad
    return w_hwio.reshape(kh * kw * cin, cout).T.astype(jnp.bfloat16)


def conv_residual_blocks_forward(x_nchw, params):
    """Pallas implementation of ConvResidualBlocks.forward (NCHW in/out, f32)."""
    N, cin, H, W = x_nchw.shape
    hw = H * W
    cin_p = _round_up(max(cin, 8), 8)

    # NCHW -> flattened channel-major (free reshape); zero-pad channels to a
    # multiple of 8 so im2col sublane offsets stay aligned.
    x = x_nchw.reshape(N, cin, hw).astype(jnp.float32)
    if cin_p > cin:
        x = jnp.pad(x, ((0, 0), (0, cin_p - cin), (0, 0)))

    w0, b0 = params["first"]
    cout = w0.shape[-1]
    w0_pk = _pack_conv_w(w0, cin_pad=cin_p)
    b0_pk = b0.reshape(cout, 1).astype(jnp.float32)

    fea = _first_conv(x, w0_pk, b0_pk, H=H, W=W)        # conv + LeakyReLU(0.1)

    blocks = params["blocks"]
    if blocks:
        w1s = jnp.stack([_pack_conv_w(w1) for (w1, _, _, _) in blocks])
        b1s = jnp.stack([b1.reshape(cout, 1) for (_, b1, _, _) in blocks]
                        ).astype(jnp.float32)
        w2s = jnp.stack([_pack_conv_w(w2) for (_, _, w2, _) in blocks])
        b2s = jnp.stack([b2.reshape(cout, 1) for (_, _, _, b2) in blocks]
                        ).astype(jnp.float32)
        fea = _res_chain(fea, w1s, b1s, w2s, b2s, H=H, W=W)

    return fea.reshape(N, cout, H, W)                    # already NCHW


# ------------------------------ pure-JAX reference --------------------------- #

def _ref_conv(x_nhwc, w_hwio, b):
    y = jax.lax.conv_general_dilated(
        x_nhwc, w_hwio, window_strides=(1, 1), padding="SAME",
        dimension_numbers=("NHWC", "HWIO", "NHWC"))
    return y + b


def ref_forward(x_nchw, params):
    x = jnp.transpose(x_nchw, (0, 2, 3, 1))
    w0, b0 = params["first"]
    fea = _ref_conv(x, w0, b0)
    fea = jnp.where(fea >= 0, fea, 0.1 * fea)
    for w1, b1, w2, b2 in params["blocks"]:
        t = jnp.maximum(_ref_conv(fea, w1, b1), 0.0)
        fea = fea + _ref_conv(t, w2, b2)
    return jnp.transpose(fea, (0, 3, 1, 2))


# --------------------------------- parameters -------------------------------- #

def init_params(key, num_in_ch, num_out_ch, num_block):
    """Deterministic synthetic init (same shapes as the PyTorch module)."""
    def conv_params(k, cin, cout, scale):
        kw, kb = jax.random.split(k)
        w = jax.random.normal(kw, (3, 3, cin, cout), jnp.float32) * scale
        b = jax.random.normal(kb, (cout,), jnp.float32) * 0.01
        return w, b

    keys = jax.random.split(key, 1 + 2 * num_block)
    first = conv_params(keys[0], num_in_ch, num_out_ch, 0.1)
    blocks = []
    for i in range(num_block):
        w1, b1 = conv_params(keys[1 + 2 * i], num_out_ch, num_out_ch, 0.05)
        w2, b2 = conv_params(keys[2 + 2 * i], num_out_ch, num_out_ch, 0.05)
        blocks.append((w1, b1, w2, b2))
    return {"first": first, "blocks": blocks}


# ------------------------------------ main ----------------------------------- #

if __name__ == "__main__":
    num_in_ch, num_out_ch, num_block = 4, 32, 2
    N, H, W = 2, 16, 16

    key = jax.random.PRNGKey(0)
    k_x, k_p = jax.random.split(key)
    x = jax.random.normal(k_x, (N, num_in_ch, H, W), jnp.float32)   # NCHW
    params = init_params(k_p, num_in_ch, num_out_ch, num_block)

    out = jax.block_until_ready(conv_residual_blocks_forward(x, params))
    ref = jax.block_until_ready(ref_forward(x, params))

    assert out.shape == (N, num_out_ch, H, W), out.shape
    # bf16 MXU operands (carry stays f32 in VMEM) vs f32 reference.
    assert jnp.allclose(out, ref, atol=5e-2, rtol=5e-2), (
        float(jnp.max(jnp.abs(out - ref))))

    print("KERNEL_OK")
</pallas_src>

<mosaic_0001>
module attributes {stable_mosaic.version = 11 : i64} {
  func.func @_first_conv_kernel(%arg0: i32, %arg1: memref<1x8x256xf32, #tpu.memory_space<vmem>>, %arg2: memref<32x72xbf16, #tpu.memory_space<vmem>>, %arg3: memref<32x1xf32, #tpu.memory_space<vmem>>, %arg4: memref<1x32x256xf32, #tpu.memory_space<vmem>>, %arg5: memref<8x512xbf16, #tpu.memory_space<vmem>>, %arg6: memref<72x256xbf16, #tpu.memory_space<vmem>>) attributes {dimension_semantics = [#tpu.dimension_semantics<parallel>], iteration_bounds = array<i64: 2>, scalar_prefetch = 0 : i64, scratch_operands = 2 : i64, tpu.core_type = #tpu.core_type<tc>, window_params = [{transform_indices = @transform_0, window_bounds = array<i64: 1, 8, 256>}, {pipeline_mode = #tpu.pipeline_mode<synchronous>, transform_indices = @transform_1, window_bounds = array<i64: 32, 72>}, {pipeline_mode = #tpu.pipeline_mode<synchronous>, transform_indices = @transform_2, window_bounds = array<i64: 32, 1>}, {transform_indices = @transform_3, window_bounds = array<i64: 1, 32, 256>}]} {
    %cst = arith.constant 0.000000e+00 : bf16
    %0 = vector.broadcast %cst : bf16 to vector<8x128xbf16>
    %c0 = arith.constant 0 : index
    %c0_0 = arith.constant 0 : index
    %1 = vector.load %arg5[%c0, %c0_0] : memref<8x512xbf16, #tpu.memory_space<vmem>>, vector<8x128xbf16>
    tpu.vector_store %arg5[%c0, %c0_0], %0 {strides = array<i32>} : memref<8x512xbf16, #tpu.memory_space<vmem>>, vector<8x128xbf16>,
    %cst_1 = arith.constant 0.000000e+00 : bf16
    %2 = vector.broadcast %cst_1 : bf16 to vector<8x128xbf16>
    %c0_2 = arith.constant 0 : index
    %c384 = arith.constant 384 : index
    %3 = vector.load %arg5[%c0_2, %c384] : memref<8x512xbf16, #tpu.memory_space<vmem>>, vector<8x128xbf16>
    tpu.vector_store %arg5[%c0_2, %c384], %2 {strides = array<i32>} : memref<8x512xbf16, #tpu.memory_space<vmem>>, vector<8x128xbf16>,
    %c0_3 = arith.constant 0 : index
    %c0_4 = arith.constant 0 : index
    %c0_5 = arith.constant 0 : index
    %4 = vector.load %arg1[%c0_3, %c0_4, %c0_5] : memref<1x8x256xf32, #tpu.memory_space<vmem>>, vector<1x8x256xf32>
    %5 = vector.shape_cast %4 : vector<1x8x256xf32> to vector<8x256xf32>
    %c0_6 = arith.constant 0 : index
    %c0_7 = arith.constant 0 : index
    %6 = vector.load %arg2[%c0_6, %c0_7] : memref<32x72xbf16, #tpu.memory_space<vmem>>, vector<32x72xbf16>
    %c0_8 = arith.constant 0 : index
    %c0_9 = arith.constant 0 : index
    %7 = vector.load %arg3[%c0_8, %c0_9] : memref<32x1xf32, #tpu.memory_space<vmem>>, vector<32x1xf32>
    %8 = arith.truncf %5 : vector<8x256xf32> to vector<8x256xbf16>
    %c0_10 = arith.constant 0 : index
    %c128 = arith.constant 128 : index
    %9 = vector.load %arg5[%c0_10, %c128] : memref<8x512xbf16, #tpu.memory_space<vmem>>, vector<8x256xbf16>
    tpu.vector_store %arg5[%c0_10, %c128], %8 {strides = array<i32>} : memref<8x512xbf16, #tpu.memory_space<vmem>>, vector<8x256xbf16>,
    %10 = tpu.iota {dimensions = array<i32: 1>} : vector<8x256xi32>
    %c16_i32 = arith.constant 16 : i32
    %c0_i32 = arith.constant 0 : i32
    %11 = arith.cmpi eq, %c16_i32, %c0_i32 : i32
    %c1_i32 = arith.constant 1 : i32
    %12 = arith.select %11, %c1_i32, %c16_i32 : i32
    %13 = vector.broadcast %12 : i32 to vector<8x256xi32>
    %14 = arith.remsi %10, %13 : vector<8x256xi32>
    %c0_i32_11 = arith.constant 0 : i32
    %15 = vector.broadcast %c0_i32_11 : i32 to vector<8x256xi32>
    %16 = arith.cmpi ne, %14, %15 : vector<8x256xi32>
    %c0_i32_12 = arith.constant 0 : i32
    %17 = vector.broadcast %c0_i32_12 : i32 to vector<8x256xi32>
    %18 = arith.cmpi slt, %14, %17 : vector<8x256xi32>
    %c0_i32_13 = arith.constant 0 : i32
    %19 = arith.cmpi slt, %12, %c0_i32_13 : i32
    %20 = vector.broadcast %19 : i1 to vector<8x256xi1>
    %21 = vector.broadcast %20 : vector<8x256xi1> to vector<8x256xi1>
    %22 = arith.xori %18, %21 : vector<8x256xi1>
    %23 = arith.andi %22, %16 : vector<8x256xi1>
    %24 = vector.broadcast %12 : i32 to vector<8x256xi32>
    %25 = arith.addi %14, %24 : vector<8x256xi32>
    %26 = arith.select %23, %25, %14 : vector<8x256xi1>, vector<8x256xi32>
    %c0_i32_14 = arith.constant 0 : i32
    %27 = vector.broadcast %c0_i32_14 : i32 to vector<8x256xi32>
    %28 = arith.cmpi eq, %26, %27 : vector<8x256xi32>
    %c15_i32 = arith.constant 15 : i32
    %29 = vector.broadcast %c15_i32 : i32 to vector<8x256xi32>
    %30 = arith.cmpi eq, %26, %29 : vector<8x256xi32>
    %c0_15 = arith.constant 0 : index
    %c111 = arith.constant 111 : index
    %31 = vector.load %arg5[%c0_15, %c111] : memref<8x512xbf16, #tpu.memory_space<vmem>>, vector<8x256xbf16>
    %cst_16 = arith.constant 0.000000e+00 : bf16
    %32 = vector.broadcast %cst_16 : bf16 to vector<8x256xbf16>
    %33 = arith.select %28, %32, %31 : vector<8x256xi1>, vector<8x256xbf16>
    %c0_17 = arith.constant 0 : index
    %c0_18 = arith.constant 0 : index
    %34 = vector.load %arg6[%c0_17, %c0_18] : memref<72x256xbf16, #tpu.memory_space<vmem>>, vector<8x256xbf16>
    tpu.vector_store %arg6[%c0_17, %c0_18], %33 {strides = array<i32>} : memref<72x256xbf16, #tpu.memory_space<vmem>>, vector<8x256xbf16>,
    %c0_19 = arith.constant 0 : index
    %c112 = arith.constant 112 : index
    %35 = vector.load %arg5[%c0_19, %c112] : memref<8x512xbf16, #tpu.memory_space<vmem>>, vector<8x256xbf16>
    %c8 = arith.constant 8 : index
    %c0_20 = arith.constant 0 : index
    %36 = vector.load %arg6[%c8, %c0_20] : memref<72x256xbf16, #tpu.memory_space<vmem>>, vector<8x256xbf16>
    tpu.vector_store %arg6[%c8, %c0_20], %35 {strides = array<i32>} : memref<72x256xbf16, #tpu.memory_space<vmem>>, vector<8x256xbf16>,
    %c0_21 = arith.constant 0 : index
    %c113 = arith.constant 113 : index
    %37 = vector.load %arg5[%c0_21, %c113] : memref<8x512xbf16, #tpu.memory_space<vmem>>, vector<8x256xbf16>
    %cst_22 = arith.constant 0.000000e+00 : bf16
    %38 = vector.broadcast %cst_22 : bf16 to vector<8x256xbf16>
    %39 = arith.select %30, %38, %37 : vector<8x256xi1>, vector<8x256xbf16>
    %c16 = arith.constant 16 : index
    %c0_23 = arith.constant 0 : index
    %40 = vector.load %arg6[%c16, %c0_23] : memref<72x256xbf16, #tpu.memory_space<vmem>>, vector<8x256xbf16>
    tpu.vector_store %arg6[%c16, %c0_23], %39 {strides = array<i32>} : memref<72x256xbf16, #tpu.memory_space<vmem>>, vector<8x256xbf16>,
    %c0_24 = arith.constant 0 : index
    %c127 = arith.constant 127 : index
    %41 = vector.load %arg5[%c0_24, %c127] : memref<8x512xbf16, #tpu.memory_space<vmem>>, vector<8x256xbf16>
    %cst_25 = arith.constant 0.000000e+00 : bf16
    %42 = vector.broadcast %cst_25 : bf16 to vector<8x256xbf16>
    %43 = arith.select %28, %42, %41 : vector<8x256xi1>, vector<8x256xbf16>
    %c24 = arith.constant 24 : index
    %c0_26 = arith.constant 0 : index
    %44 = vector.load %arg6[%c24, %c0_26] : memref<72x256xbf16, #tpu.memory_space<vmem>>, vector<8x256xbf16>
    tpu.vector_store %arg6[%c24, %c0_26], %43 {strides = array<i32>} : memref<72x256xbf16, #tpu.memory_space<vmem>>, vector<8x256xbf16>,
    %c0_27 = arith.constant 0 : index
    %c128_28 = arith.constant 128 : index
    %45 = vector.load %arg5[%c0_27, %c128_28] : memref<8x512xbf16, #tpu.memory_space<vmem>>, vector<8x256xbf16>
    %c32 = arith.constant 32 : index
    %c0_29 = arith.constant 0 : index
    %46 = vector.load %arg6[%c32, %c0_29] : memref<72x256xbf16, #tpu.memory_space<vmem>>, vector<8x256xbf16>
    tpu.vector_store %arg6[%c32, %c0_29], %45 {strides = array<i32>} : memref<72x256xbf16, #tpu.memory_space<vmem>>, vector<8x256xbf16>,
    %c0_30 = arith.constant 0 : index
    %c129 = arith.constant 129 : index
    %47 = vector.load %arg5[%c0_30, %c129] : memref<8x512xbf16, #tpu.memory_space<vmem>>, vector<8x256xbf16>
    %cst_31 = arith.constant 0.000000e+00 : bf16
    %48 = vector.broadcast %cst_31 : bf16 to vector<8x256xbf16>
    %49 = arith.select %30, %48, %47 : vector<8x256xi1>, vector<8x256xbf16>
    %c40 = arith.constant 40 : index
    %c0_32 = arith.constant 0 : index
    %50 = vector.load %arg6[%c40, %c0_32] : memref<72x256xbf16, #tpu.memory_space<vmem>>, vector<8x256xbf16>
    tpu.vector_store %arg6[%c40, %c0_32], %49 {strides = array<i32>} : memref<72x256xbf16, #tpu.memory_space<vmem>>, vector<8x256xbf16>,
    %c0_33 = arith.constant 0 : index
    %c143 = arith.constant 143 : index
    %51 = vector.load %arg5[%c0_33, %c143] : memref<8x512xbf16, #tpu.memory_space<vmem>>, vector<8x256xbf16>
    %cst_34 = arith.constant 0.000000e+00 : bf16
    %52 = vector.broadcast %cst_34 : bf16 to vector<8x256xbf16>
    %53 = arith.select %28, %52, %51 : vector<8x256xi1>, vector<8x256xbf16>
    %c48 = arith.constant 48 : index
    %c0_35 = arith.constant 0 : index
    %54 = vector.load %arg6[%c48, %c0_35] : memref<72x256xbf16, #tpu.memory_space<vmem>>, vector<8x256xbf16>
    tpu.vector_store %arg6[%c48, %c0_35], %53 {strides = array<i32>} : memref<72x256xbf16, #tpu.memory_space<vmem>>, vector<8x256xbf16>,
    %c0_36 = arith.constant 0 : index
    %c144 = arith.constant 144 : index
    %55 = vector.load %arg5[%c0_36, %c144] : memref<8x512xbf16, #tpu.memory_space<vmem>>, vector<8x256xbf16>
    %c56 = arith.constant 56 : index
    %c0_37 = arith.constant 0 : index
    %56 = vector.load %arg6[%c56, %c0_37] : memref<72x256xbf16, #tpu.memory_space<vmem>>, vector<8x256xbf16>
    tpu.vector_store %arg6[%c56, %c0_37], %55 {strides = array<i32>} : memref<72x256xbf16, #tpu.memory_space<vmem>>, vector<8x256xbf16>,
    %c0_38 = arith.constant 0 : index
    %c145 = arith.constant 145 : index
    %57 = vector.load %arg5[%c0_38, %c145] : memref<8x512xbf16, #tpu.memory_space<vmem>>, vector<8x256xbf16>
    %cst_39 = arith.constant 0.000000e+00 : bf16
    %58 = vector.broadcast %cst_39 : bf16 to vector<8x256xbf16>
    %59 = arith.select %30, %58, %57 : vector<8x256xi1>, vector<8x256xbf16>
    %c64 = arith.constant 64 : index
    %c0_40 = arith.constant 0 : index
    %60 = vector.load %arg6[%c64, %c0_40] : memref<72x256xbf16, #tpu.memory_space<vmem>>, vector<8x256xbf16>
    tpu.vector_store %arg6[%c64, %c0_40], %59 {strides = array<i32>} : memref<72x256xbf16, #tpu.memory_space<vmem>>, vector<8x256xbf16>,
    %c0_41 = arith.constant 0 : index
    %c0_42 = arith.constant 0 : index
    %61 = vector.load %arg6[%c0_41, %c0_42] : memref<72x256xbf16, #tpu.memory_space<vmem>>, vector<72x256xbf16>
    %cst_43 = arith.constant dense<0.000000e+00> : vector<32x256xf32>
    %62 = tpu.matmul %6, %61, %cst_43 {dimension_numbers = #tpu.dot_dimension_numbers<[1], [0], [0], [1], [0, 0, 1, 1], [], []>} : vector<32x72xbf16>, vector<72x256xbf16>, vector<32x256xf32> -> vector<32x256xf32>
    %63 = vector.broadcast %7 : vector<32x1xf32> to vector<32x256xf32>
    %64 = arith.addf %62, %63 : vector<32x256xf32>
    %cst_44 = arith.constant 0.000000e+00 : f32
    %65 = vector.broadcast %cst_44 : f32 to vector<32x256xf32>
    %66 = arith.cmpf oge, %64, %65 : vector<32x256xf32>
    %cst_45 = arith.constant 1.000000e-01 : f32
    %67 = vector.broadcast %cst_45 : f32 to vector<32x256xf32>
    %68 = arith.mulf %67, %64 : vector<32x256xf32>
    %69 = arith.select %66, %64, %68 : vector<32x256xi1>, vector<32x256xf32>
    %c0_46 = arith.constant 0 : index
    %c0_47 = arith.constant 0 : index
    %c0_48 = arith.constant 0 : index
    %70 = vector.load %arg4[%c0_46, %c0_47, %c0_48] : memref<1x32x256xf32, #tpu.memory_space<vmem>>, vector<1x32x256xf32>
    %71 = vector.shape_cast %70 : vector<1x32x256xf32> to vector<32x256xf32>
    %72 = vector.shape_cast %69 : vector<32x256xf32> to vector<1x32x256xf32>
    tpu.vector_store %arg4[%c0_46, %c0_47, %c0_48], %72 {strides = array<i32>} : memref<1x32x256xf32, #tpu.memory_space<vmem>>, vector<1x32x256xf32>,
    return
  }
  func.func @transform_0(%arg0: i32) -> (i32, i32, i32) {
    %c0_i32 = arith.constant 0 : i32
    %c0_i32_0 = arith.constant 0 : i32
    %c0_i32_1 = arith.constant 0 : i32
    return %arg0, %c0_i32, %c0_i32_0 : i32, i32, i32
  }
  func.func @transform_1(%arg0: i32) -> (i32, i32) {
    %c0_i32 = arith.constant 0 : i32
    %c0_i32_0 = arith.constant 0 : i32
    %c0_i32_1 = arith.constant 0 : i32
    return %c0_i32, %c0_i32_0 : i32, i32
  }
  func.func @transform_2(%arg0: i32) -> (i32, i32) {
    %c0_i32 = arith.constant 0 : i32
    %c0_i32_0 = arith.constant 0 : i32
    %c0_i32_1 = arith.constant 0 : i32
    return %c0_i32, %c0_i32_0 : i32, i32
  }
  func.func @transform_3(%arg0: i32) -> (i32, i32, i32) {
    %c0_i32 = arith.constant 0 : i32
    %c0_i32_0 = arith.constant 0 : i32
    %c0_i32_1 = arith.constant 0 : i32
    return %arg0, %c0_i32, %c0_i32_0 : i32, i32, i32
  }
}

</mosaic_0001>

<llo_original>
// kernel: tpu_custom_call.1
$region0: #{tpu_custom_call.1}
  #allocation0 [shape = 'u32[]', space=smem, size = 0x4, offset = 0x4, fixed_abs, tag = 'smem constant byte address 0x4 - core index']
  #allocation1 [shape = 'u32[144,128]{1,0:T(1,128)}', space=vmem, size = 0x12000, scoped, tag = 'internal scratch']
  #allocation2 [shape = 'bf16[8,512]{1,0:T(8,128)(2,1)}', space=vmem, size = 0x2000, scoped, tag = 'scratch operand']
  #allocation3 [shape = 'bf16[72,256]{1,0:T(8,128)(2,1)}', space=vmem, size = 0x9000, scoped, tag = 'scratch operand']
  %s0 = inlined_call_operand.vmem [shape: f32[2,8,256], index: 0, kind: input, shape index: {}]
  %s1 = inlined_call_operand.hbm [shape: bf16[32,72], index: 1, kind: input, shape index: {}]
  %s2 = inlined_call_operand.vmem [shape: f32[32,1], index: 2, kind: input, shape index: {}]
  %s3 = inlined_call_operand.hbm [shape: f32[2,32,256], index: 3, kind: output, shape index: {}]
  %s4 = sld [smem:[#allocation0]]
  $region49: #{tpu_custom_call.1} parent=0
    _
  %s6 = ssub.s32 1, %s4
  %s7 = scalar_select 0, %s6, %s4
  $region1: #{tpu_custom_call.1} parent=0
    #allocation4 [shape = 'u8[8192]{0}', space=vmem, size = 0x2000, scoped, tag = 'input window, operand 1, single buffered']
    #allocation5 [shape = 's32[2]{0}', space=sflag, size = 0x8, scoped, tag = 'scoped memory for tpu_custom_call.1']
    #allocation6 [shape = 's32[2]{0}', space=sflag, size = 0x8, scoped, tag = 'scoped memory for tpu_custom_call.1']
    #allocation7 [shape = 'u8[65536]{0}', space=vmem, size = 0x10000, scoped, tag = 'output window, operand 0']
    %8 = vsyncpa [#allocation5], 0
    %9 = vsyncpa [#allocation6], 0
    %s10 = scalar_lea.sflag [#allocation6], 1
    %11 = vsyncpa %s10, 0
    loop: start=0, step=1, limit=4
    $region2: #{tpu_custom_call.1} parent=1 // loop_pre_header
      _
    $region3: #{tpu_custom_call.1} parent=1 // loop_header
      %s13 = sphi 0, %s17
      %p14 = scmp.ge.s32.totalorder %s13, 4
      %s23 = sphi 0, %s25
      %s26 = sphi 0, %s23
      %s27 = sphi 0, %s26
      %s43 = sphi 0, %s27
      %s47 = sphi 0, %s47
      %s49 = sphi 0, %s47
      %s50 = sphi 0, %s49
      %s64 = sphi 0, %s50
      %s68 = sphi 0, %s68
      %s70 = sphi 0, %s68
      %s71 = sphi 0, %s70
      %s85 = sphi 0, %s71
      %s91 = sphi 0, %s93
      %s94 = sphi 0, %s91
      %s95 = sphi 0, %s94
      %s111 = sphi 0, %s95
    $region4: #{tpu_custom_call.1} parent=1 // loop_header_branch
      %16 = sbr.rel (%p14) target = $region8
    $region5: #{tpu_custom_call.1} parent=1 // loop_body
      %s18 = ssub.s32 %s13, 1
      %s19 = ssub.s32 %s13, 2
      %s20 = sadd.s32 %s13, 1
      %s21 = ssub.s32 %s13, %s20
      %p22 = scmp.eq.s32.totalorder %s21, 0
      %s24 = sadd.s32 %s23, 1
      %s25 = scalar_select %p22, %s23, %s24
      %p28 = pneg %p22
      %p29 = scmp.eq.s32.totalorder %s13, 1
      %p30 = por %p28, %p29
      %p31 = scmp.ne.s32.totalorder %s23, %s26
      %p32 = scmp.eq.s32.totalorder %s13, 0
      %p33 = por %p31, %p32
      %p34 = scmp.ne.s32.totalorder %s23, %s26
      %p35 = scmp.eq.s32.totalorder %s18, 1
      %p36 = por %p34, %p35
      %p37 = scmp.ne.s32.totalorder %s26, %s27
      %p38 = scmp.eq.s32.totalorder %s18, 0
      %p39 = por %p37, %p38
      %p40 = scmp.ne.s32.totalorder %s26, %s27
      %p41 = scmp.eq.s32.totalorder %s19, 1
      %p42 = por %p40, %p41
      %p44 = scmp.ne.s32.totalorder %s27, %s43
      %p45 = scmp.eq.s32.totalorder %s19, 0
      %p46 = por %p44, %p45
      %s48 = sadd.s32 %s47, 1
      %p51 = scmp.eq.s32.totalorder %s13, 1
      %p52 = scmp.ne.s32.totalorder %s47, %s49
      %p53 = scmp.eq.s32.totalorder %s13, 0
      %p54 = por %p52, %p53
      %p55 = scmp.ne.s32.totalorder %s47, %s49
      %p56 = scmp.eq.s32.totalorder %s18, 1
      %p57 = por %p55, %p56
      %p58 = scmp.ne.s32.totalorder %s49, %s50
      %p59 = scmp.eq.s32.totalorder %s18, 0
      %p60 = por %p58, %p59
      %p61 = scmp.ne.s32.totalorder %s49, %s50
      %p62 = scmp.eq.s32.totalorder %s19, 1
      %p63 = por %p61, %p62
      %p65 = scmp.ne.s32.totalorder %s50, %s64
      %p66 = scmp.eq.s32.totalorder %s19, 0
      %p67 = por %p65, %p66
      %s69 = sadd.s32 %s68, 1
      %p72 = scmp.eq.s32.totalorder %s13, 1
      %p73 = scmp.ne.s32.totalorder %s68, %s70
      %p74 = scmp.eq.s32.totalorder %s13, 0
      %p75 = por %p73, %p74
      %p76 = scmp.ne.s32.totalorder %s68, %s70
      %p77 = scmp.eq.s32.totalorder %s18, 1
      %p78 = por %p76, %p77
      %p79 = scmp.ne.s32.totalorder %s70, %s71
      %p80 = scmp.eq.s32.totalorder %s18, 0
      %p81 = por %p79, %p80
      %p82 = scmp.ne.s32.totalorder %s70, %s71
      %p83 = scmp.eq.s32.totalorder %s19, 1
      %p84 = por %p82, %p83
      %p86 = scmp.ne.s32.totalorder %s71, %s85
      %p87 = scmp.eq.s32.totalorder %s19, 0
      %p88 = por %p86, %p87
      %s89 = ssub.s32 %s13, %s20
      %p90 = scmp.eq.s32.totalorder %s89, 0
      %s92 = sadd.s32 %s91, 1
      %s93 = scalar_select %p90, %s91, %s92
      %p96 = pneg %p90
      %p97 = scmp.eq.s32.totalorder %s13, 1
      %p98 = por %p96, %p97
      %p99 = scmp.ne.s32.totalorder %s91, %s94
      %p100 = scmp.eq.s32.totalorder %s13, 0
      %p101 = por %p99, %p100
      %p102 = scmp.ne.s32.totalorder %s91, %s94
      %p103 = scmp.eq.s32.totalorder %s18, 1
      %p104 = por %p102, %p103
      %p105 = scmp.ne.s32.totalorder %s94, %s95
      %p106 = scmp.eq.s32.totalorder %s18, 0
      %p107 = por %p105, %p106
      %p108 = scmp.ne.s32.totalorder %s94, %s95
      %p109 = scmp.eq.s32.totalorder %s19, 1
      %p110 = por %p108, %p109
      %p112 = scmp.ne.s32.totalorder %s95, %s111
      %p113 = scmp.eq.s32.totalorder %s19, 0
      %p114 = por %p112, %p113
      %p115 = scmp.le.s32.totalorder 1, %s13
      %p116 = scmp.lt.s32.totalorder %s13, 3
      %p117 = pnand %p115, %p116
      %p118 = pneg %p117
      // Predicated region
      $region9: #{tpu_custom_call.1} parent=5 // pred_check
        _
      $region10: #{tpu_custom_call.1} parent=5 // pred_check_branch
        %120 = sbr.rel (%p117) target = $region12
      $region11: #{tpu_custom_call.1} parent=5 // pred_region
        %s121 = ssub.s32 %s13, 1
        // Predicated region
        $region13: #{tpu_custom_call.1} parent=11 // pred_check
          %p122 = pneg %p60
        $region14: #{tpu_custom_call.1} parent=11 // pred_check_branch
          %124 = sbr.rel (%p122) target = $region16
        $region15: #{tpu_custom_call.1} parent=11 // pred_region
          %s126 = ssub.s32 256, 256
          %127 = vsyncadd [#allocation5], %s126
          %s128 = sshll.u32 [#allocation4], 4
          %s129 = int_to_ptr.vmem [resolvable:$true] %s128
          %134 = dma.hbm_to_vmem [thread:$0]  %s1, 256, %s129, [#allocation5], 64, 64, 4
        $region16: #{tpu_custom_call.1} parent=11 // pred_fallthru
          _
        // Predicated region
        $region17: #{tpu_custom_call.1} parent=11 // pred_check
          %p135 = pneg %p81
        $region18: #{tpu_custom_call.1} parent=11 // pred_check_branch
          %137 = sbr.rel (%p135) target = $region20
        $region19: #{tpu_custom_call.1} parent=11 // pred_region
          _
        $region20: #{tpu_custom_call.1} parent=11 // pred_fallthru
          _
      $region12: #{tpu_custom_call.1} parent=5 // pred_fallthru
        _
      %p138 = scmp.lt.s32.totalorder %s13, 2
      // Predicated region
      $region21: #{tpu_custom_call.1} parent=5 // pred_check
        %p139 = pneg %p138
      $region22: #{tpu_custom_call.1} parent=5 // pred_check_branch
        %141 = sbr.rel (%p139) target = $region24
      $region23: #{tpu_custom_call.1} parent=5 // pred_region
        // Predicated region
        $region25: #{tpu_custom_call.1} parent=23 // pred_check
          %p142 = pneg %p33
        $region26: #{tpu_custom_call.1} parent=23 // pred_check_branch
          %144 = sbr.rel (%p142) target = $region28
        $region27: #{tpu_custom_call.1} parent=23 // pred_region
          %p145 = scmp.lt.s32.totalorder %s13, 1
          %s146 = scalar_select %p145, %s13, 1
          %s147 = smul.addr %s146, 2
          %s148 = smul.addr %s147, 8
          %s149 = scalar_lea.vmem %s0, %s148
        $region28: #{tpu_custom_call.1} parent=23 // pred_fallthru
          _
      $region24: #{tpu_custom_call.1} parent=5 // pred_fallthru
        _
      %p150 = scmp.le.s32.totalorder 1, %s13
      %p151 = scmp.lt.s32.totalorder %s13, 3
      %p152 = pnand %p150, %p151
      %p153 = pneg %p152
      // Predicated region
      $region29: #{tpu_custom_call.1} parent=5 // pred_check
        _
      $region30: #{tpu_custom_call.1} parent=5 // pred_check_branch
        %155 = sbr.rel (%p152) target = $region32
      $region31: #{tpu_custom_call.1} parent=5 // pred_region
        %s156 = ssub.s32 %s13, 1
        // Predicated region
        $region33: #{tpu_custom_call.1} parent=31 // pred_check
          %p157 = pneg %p60
        $region34: #{tpu_custom_call.1} parent=31 // pred_check_branch
          %159 = sbr.rel (%p157) target = $region36
        $region35: #{tpu_custom_call.1} parent=31 // pred_region
          %160 = dma.done [#allocation5], 256
        $region36: #{tpu_custom_call.1} parent=31 // pred_fallthru
          _
        %p161 = scmp.lt.s32.totalorder %s18, 1
        %s162 = scalar_select %p161, %s18, 1
        %s163 = smul.addr %s162, 2
        %s164 = smul.addr %s163, 8
        %s165 = scalar_lea.vmem %s0, %s164
        %p166 = pneg %p39
        %p167 = pneg %p36
        %p168 = pneg %p60
        %p169 = pneg %p57
        %p170 = pneg %p81
        %p171 = pneg %p78
        %p172 = pneg %p107
        %p173 = pneg %p104
        %s174 = sand.u32 %s94, 1
        %s175 = scalar_lea.sflag [#allocation6], %s174
        %s176 = sand.u32 %s94, 1
        %s177 = smul.addr %s176, 64
        %s178 = scalar_lea.vmem [#allocation7], %s177
        %p179 = scmp.lt.s32.totalorder %s18, 1
        %s180 = scalar_select %p179, %s18, 1
        %s181 = smul.addr %s180, 2
        %s182 = smul.addr %s181, 8
        %s183 = scalar_lea.vmem %s0, %s182
        %187 = vst [vmem:[#allocation2] sm:$0xf] 0
        %188 = vst [vmem:[#allocation2 + $0xc] sm:$0xf] 0
        %v189 = vld [vmem:[%s183] sm:$0xff]
        %v190 = vld [vmem:[%s183 + $0x8] sm:$0xff]
        %v191 = vld [vmem:[#allocation4] sm:$0xf]
        %v192 = vld [vmem:[#allocation4 + $0x4] sm:$0xf]
        %v193 = vld [vmem:[#allocation4 + $0x8] sm:$0xf]
        %v194 = vld [vmem:[#allocation4 + $0xc] sm:$0xf]
        %v195 = vld [vmem:[%s2] sm:$0xff]
        %v196 = vld [vmem:[%s2 + $0x8] sm:$0xff]
        %v197 = vld [vmem:[%s2 + $0x10] sm:$0xff]
        %v198 = vld [vmem:[%s2 + $0x18] sm:$0xff]
        %v199 = vpack.c.bf16 %v189, %v189
        %v200 = vpack.c.bf16 %v190, %v190
        %v203 = vunpack.c.l.b16 %v199
        %v204 = vunpack.c.l.b16 %v200
        %v205 = vpack.c.b16 %v204, %v203
        %207 = vst [vmem:[#allocation2 + $0x4] sm:$0xff] %v205
        %v208 = vlaneseq
        %v209 = vand.u32 %v208, 127
        %v210 = vadd.s32 %v209, 128
        %vm211 = vcmp.lt.s32.totalorder %v209, 0
        %v212 = vsub.s32 0, %v209
        %v213 = vsel %vm211, %v212, %v209
        %v214 = vshrl.u32 %v213, 4
        %v215 = vand.u32 %v213, 15
        %v216 = vsub.s32 0, %v215
        %v217 = vsel %vm211, %v216, %v215
        %vm218 = vcmp.lt.s32.totalorder %v210, 0
        %v219 = vsub.s32 0, %v210
        %v220 = vsel %vm218, %v219, %v210
        %v221 = vshrl.u32 %v220, 4
        %v222 = vand.u32 %v220, 15
        %v223 = vsub.s32 0, %v222
        %v224 = vsel %vm218, %v223, %v222
        %vm225 = vcmp.ne.s32.totalorder %v217, 0
        %vm226 = vcmp.ne.s32.totalorder %v224, 0
        %vm227 = vcmp.lt.s32.totalorder %v217, 0
        %vm228 = vcmp.lt.s32.totalorder %v224, 0
        %vm229 = vmand %vm227, %vm225
        %vm230 = vmand %vm228, %vm226
        %v231 = vadd.s32 %v217, 16
        %v232 = vadd.s32 %v224, 16
        %v233 = vsel %vm229, %v231, %v217
        %v234 = vsel %vm230, %v232, %v224
        %vm235 = vcmp.eq.s32.totalorder %v233, 0
        %vm236 = vcmp.eq.s32.totalorder %v234, 0
        %vm237 = vcmp.eq.s32.totalorder %v233, 15
        %vm238 = vcmp.eq.s32.totalorder %v234, 15
        %v239 = vld [vmem:[#allocation2] sm:$0xff]
        %v240 = vld [vmem:[#allocation2 + $0x8] sm:$0xf]
        %vm241 = vmpackc.low %vm236, %vm235
        %v242 = vsel %vm241, 65537, 0
        %243 = vrot.lane.b32.xlu0 %v242, 111
        %v244 = vpop.permute.xlu0 %243
        %v245 = vrot.slane %v244, 4
        %vm246 = vcmask 908288
        %v247 = vsel %vm246, %v245, %v244
        %vm248 = vcmp.ne.s16.totalorder %v247, 0
        %vm249 = vcmp.ne.s16.totalorder %v245, 0
        %v250 = vsel %vm248, 0, %v239
        %v251 = vsel %vm249, 0, %v240
        %254 = vrot.lane.b32.xlu0 %v250, 17
        %v255 = vpop.permute.xlu0 %254
        %256 = vrot.lane.b32.xlu0 %v251, 17
        %v257 = vpop.permute.xlu0 %256
        %v258 = vrot.slane %v255, 4
        %v259 = vrot.slane %v257, 4
        %vm260 = vcmask 1043456
        %v261 = vsel %vm260, %v258, %v259
        %vm262 = vcmask 138240
        %v263 = vsel %vm262, %v255, %v261
        %265 = vst [vmem:[#allocation3] sm:$0xff] %v263
        %v266 = vld [vmem:[#allocation2] sm:$0xff]
        %v267 = vld [vmem:[#allocation2 + $0x8] sm:$0xf]
        %270 = vrot.lane.b32.xlu0 %v266, 16
        %v271 = vpop.permute.xlu0 %270
        %272 = vrot.lane.b32.xlu0 %v267, 16
        %v273 = vpop.permute.xlu0 %272
        %v274 = vrot.slane %v271, 4
        %v275 = vrot.slane %v273, 4
        %v276 = vsel %vm260, %v274, %v275
        %vm277 = vcmask 130048
        %v278 = vsel %vm277, %v271, %v276
        %280 = vst [vmem:[#allocation3 + $0x8] sm:$0xff] %v278
        %v281 = vld [vmem:[#allocation2] sm:$0xff]
        %v282 = vld [vmem:[#allocation2 + $0x8] sm:$0xf]
        %vm283 = vmpackc.low %vm238, %vm237
        %v284 = vsel %vm283, 65537, 0
        %285 = vrot.lane.b32.xlu0 %v284, 113
        %v286 = vpop.permute.xlu0 %285
        %v287 = vrot.slane %v286, 4
        %vm288 = vcmask 924672
        %v289 = vsel %vm288, %v287, %v286
        %vm290 = vcmp.ne.s16.totalorder %v289, 0
        %vm291 = vcmp.ne.s16.totalorder %v287, 0
        %v292 = vsel %vm290, 0, %v281
        %v293 = vsel %vm291, 0, %v282
        %296 = vrot.lane.b32.xlu0 %v292, 15
        %v297 = vpop.permute.xlu0 %296
        %298 = vrot.lane.b32.xlu0 %v293, 15
        %v299 = vpop.permute.xlu0 %298
        %v300 = vrot.slane %v297, 4
        %v301 = vrot.slane %v299, 4
        %v302 = vsel %vm260, %v300, %v301
        %vm303 = vcmask 121856
        %v304 = vsel %vm303, %v297, %v302
        %306 = vst [vmem:[#allocation3 + $0x10] sm:$0xff] %v304
        %v307 = vld [vmem:[#allocation2] sm:$0xff]
        %v308 = vld [vmem:[#allocation2 + $0x8] sm:$0xf]
        %309 = vrot.lane.b32.xlu0 %v242, 127
        %v310 = vpop.permute.xlu0 %309
        %v311 = vrot.slane %v310, 4
        %vm312 = vcmask 1039360
        %v313 = vsel %vm312, %v311, %v310
        %vm314 = vcmp.ne.s16.totalorder %v313, 0
        %vm315 = vcmp.ne.s16.totalorder %v311, 0
        %v316 = vsel %vm314, 0, %v307
        %v317 = vsel %vm315, 0, %v308
        %320 = vrot.lane.b32.xlu0 %v316, 1
        %v321 = vpop.permute.xlu0 %320
        %322 = vrot.lane.b32.xlu0 %v317, 1
        %v323 = vpop.permute.xlu0 %322
        %v324 = vrot.slane %v321, 4
        %v325 = vrot.slane %v323, 4
        %v326 = vsel %vm260, %v324, %v325
        %vm327 = vcmask 7168
        %v328 = vsel %vm327, %v321, %v326
        %330 = vst [vmem:[#allocation3 + $0x18] sm:$0xff] %v328
        %v331 = vld [vmem:[#allocation2 + $0x4] sm:$0xff]
        %332 = vst [vmem:[#allocation3 + $0x20] sm:$0xff] %v331
        %v333 = vld [vmem:[#allocation2 + $0x4] sm:$0xff]
        %v334 = vld [vmem:[#allocation2 + $0xc] sm:$0xf]
        %335 = vrot.lane.b32.xlu0 %v284, 1
        %v336 = vpop.permute.xlu0 %335
        %v337 = vrot.slane %v336, 4
        %v338 = vsel %vm327, %v337, %v336
        %vm339 = vcmp.ne.s16.totalorder %v338, 0
        %vm340 = vcmp.ne.s16.totalorder %v337, 0
        %v341 = vsel %vm339, 0, %v333
        %v342 = vsel %vm340, 0, %v334
        %345 = vrot.lane.b32.xlu0 %v341, 127
        %v346 = vpop.permute.xlu0 %345
        %347 = vrot.lane.b32.xlu0 %v342, 127
        %v348 = vpop.permute.xlu0 %347
        %v349 = vrot.slane %v346, 4
        %v350 = vrot.slane %v348, 4
        %v351 = vsel %vm260, %v349, %v350
        %v352 = vsel %vm312, %v346, %v351
        %354 = vst [vmem:[#allocation3 + $0x28] sm:$0xff] %v352
        %v355 = vld [vmem:[#allocation2 + $0x4] sm:$0xff]
        %v356 = vld [vmem:[#allocation2 + $0xc] sm:$0xf]
        %357 = vrot.lane.b32.xlu0 %v242, 15
        %v358 = vpop.permute.xlu0 %357
        %v359 = vrot.slane %v358, 4
        %v360 = vsel %vm303, %v359, %v358
        %vm361 = vcmp.ne.s16.totalorder %v360, 0
        %vm362 = vcmp.ne.s16.totalorder %v359, 0
        %v363 = vsel %vm361, 0, %v355
        %v364 = vsel %vm362, 0, %v356
        %367 = vrot.lane.b32.xlu0 %v363, 113
        %v368 = vpop.permute.xlu0 %367
        %369 = vrot.lane.b32.xlu0 %v364, 113
        %v370 = vpop.permute.xlu0 %369
        %v371 = vrot.slane %v368, 4
        %v372 = vrot.slane %v370, 4
        %v373 = vsel %vm260, %v371, %v372
        %v374 = vsel %vm288, %v368, %v373
        %376 = vst [vmem:[#allocation3 + $0x30] sm:$0xff] %v374
        %v377 = vld [vmem:[#allocation2 + $0x4] sm:$0xff]
        %v378 = vld [vmem:[#allocation2 + $0xc] sm:$0xf]
        %381 = vrot.lane.b32.xlu0 %v377, 112
        %v382 = vpop.permute.xlu0 %381
        %383 = vrot.lane.b32.xlu0 %v378, 112
        %v384 = vpop.permute.xlu0 %383
        %v385 = vrot.slane %v382, 4
        %v386 = vrot.slane %v384, 4
        %v387 = vsel %vm260, %v385, %v386
        %vm388 = vcmask 916480
        %v389 = vsel %vm388, %v382, %v387
        %391 = vst [vmem:[#allocation3 + $0x38] sm:$0xff] %v389
        %v392 = vld [vmem:[#allocation2 + $0x4] sm:$0xff]
        %v393 = vld [vmem:[#allocation2 + $0xc] sm:$0xf]
        %394 = vrot.lane.b32.xlu0 %v284, 17
        %v395 = vpop.permute.xlu0 %394
        %v396 = vrot.slane %v395, 4
        %v397 = vsel %vm262, %v396, %v395
        %vm398 = vcmp.ne.s16.totalorder %v397, 0
        %vm399 = vcmp.ne.s16.totalorder %v396, 0
        %v400 = vsel %vm398, 0, %v392
        %v401 = vsel %vm399, 0, %v393
        %404 = vrot.lane.b32.xlu0 %v400, 111
        %v405 = vpop.permute.xlu0 %404
        %406 = vrot.lane.b32.xlu0 %v401, 111
        %v407 = vpop.permute.xlu0 %406
        %v408 = vrot.slane %v405, 4
        %v409 = vrot.slane %v407, 4
        %v410 = vsel %vm260, %v408, %v409
        %v411 = vsel %vm246, %v405, %v410
        %413 = vst [vmem:[#allocation3 + $0x40] sm:$0xff] %v411
        %v414 = vld [vmem:[#allocation3] sm:$0xff]
        %v415 = vld [vmem:[#allocation3 + $0x8] sm:$0xff]
        %v416 = vld [vmem:[#allocation3 + $0x10] sm:$0xff]
        %v417 = vld [vmem:[#allocation3 + $0x18] sm:$0xff]
        %v418 = vld [vmem:[#allocation3 + $0x20] sm:$0xff]
        %v419 = vld [vmem:[#allocation3 + $0x28] sm:$0xff]
        %v420 = vld [vmem:[#allocation3 + $0x30] sm:$0xff]
        %v421 = vld [vmem:[#allocation3 + $0x38] sm:$0xff]
        %v422 = vld [vmem:[#allocation3 + $0x40] sm:$0xff]
        %424 = vset.pattern.permute.xlu0 0
        %425 = vperm.xlu0 %424, %v195
        %v426 = vpop.permute.xlu0 %425
        %429 = vset.pattern.permute.xlu0 0
        %430 = vperm.xlu0 %429, %v196
        %v431 = vpop.permute.xlu0 %430
        %434 = vset.pattern.permute.xlu0 0
        %435 = vperm.xlu0 %434, %v197
        %v436 = vpop.permute.xlu0 %435
        %439 = vset.pattern.permute.xlu0 0
        %440 = vperm.xlu0 %439, %v198
        %v441 = vpop.permute.xlu0 %440
        %v447 = vunpack.c.l.b16 %v191
        %v448 = vunpack.c.l.b16 %v192
        %v449 = vunpack.c.l.b16 %v193
        %v450 = vunpack.c.l.b16 %v194
        %v451 = vpack.c.b16 %v448, %v447
        %v452 = vpack.c.b16 %v450, %v449
        %v462 = vunpack.c.l.b16 %v414
        %v463 = vunpack.c.h.b16 %v414
        %v464 = vunpack.c.l.b16 %v415
        %v465 = vunpack.c.h.b16 %v415
        %v466 = vunpack.c.l.b16 %v416
        %v467 = vunpack.c.h.b16 %v416
        %v468 = vunpack.c.l.b16 %v417
        %v469 = vunpack.c.h.b16 %v417
        %v470 = vunpack.c.l.b16 %v418
        %v471 = vunpack.c.h.b16 %v418
        %v472 = vunpack.c.l.b16 %v419
        %v473 = vunpack.c.h.b16 %v419
        %v474 = vunpack.c.l.b16 %v420
        %v475 = vunpack.c.h.b16 %v420
        %v476 = vunpack.c.l.b16 %v421
        %v477 = vunpack.c.h.b16 %v421
        %v478 = vunpack.c.l.b16 %v422
        %v479 = vunpack.c.h.b16 %v422
        %v480 = vpack.c.b16 %v464, %v462
        %v481 = vpack.c.b16 %v465, %v463
        %v482 = vpack.c.b16 %v468, %v466
        %v483 = vpack.c.b16 %v469, %v467
        %v484 = vpack.c.b16 %v472, %v470
        %v485 = vpack.c.b16 %v473, %v471
        %v486 = vpack.c.b16 %v476, %v474
        %v487 = vpack.c.b16 %v477, %v475
        %v488 = vpack.c.b16 %v478, %v478
        %v489 = vpack.c.b16 %v479, %v479
        %vm498 = vcmask 588800
        %v500 = vsel %vm498, %v451, 0
        %v503 = vsel %vm498, %v452, 0
        %vm505 = vcmask 1043456
        %v507 = vsel %vm505, %v488, 0
        %v510 = vsel %vm505, %v489, 0
        %512 = vmatprep.subr.bf16.mxu0 %v481
        %513 = vmatpush1.bf16.msra.mxu0 %v480
        %514 = vmatprep.subr.bf16.mxu0 %v483
        %515 = vmatpush1.bf16.msra.mxu0 %v482
        %516 = vmatprep.subr.bf16.mxu0 %v485
        %517 = vmatpush1.bf16.msra.mxu0 %v484
        %518 = vmatprep.subr.bf16.mxu0 %v487
        %519 = vmatpush1.bf16.msra.mxu0 %v486
        %520 = vmatprep.subr.bf16.mxu0 %v510
        %521 = vmatpush1.bf16.msra.mxu0 %v507
        %522 = vmatprep.subr.bf16.mxu0 0
        %523 = vmatpush1.bf16.msra.mxu0 0
        %524 = vmatprep.subr.bf16.mxu0 0
        %525 = vmatpush1.bf16.msra.mxu0 0
        %526 = vmatprep.subr.bf16.mxu0 0
        %527 = vmatpush1.bf16.msra.mxu0 0
        %528 = vmatprep.subr.bf16.mxu0 0
        %529 = vmatpush1.bf16.msra.mxu0 0
        %530 = vmatprep.subr.bf16.mxu0 0
        %531 = vmatpush1.bf16.msra.mxu0 0
        %532 = vmatprep.subr.bf16.mxu0 0
        %533 = vmatpush1.bf16.msra.mxu0 0
        %534 = vmatprep.subr.bf16.mxu0 0
        %535 = vmatpush1.bf16.msra.mxu0 0
        %536 = vmatprep.subr.bf16.mxu0 0
        %537 = vmatpush1.bf16.msra.mxu0 0
        %538 = vmatprep.subr.bf16.mxu0 0
        %539 = vmatpush1.bf16.msra.mxu0 0
        %540 = vmatprep.subr.bf16.mxu0 0
        %541 = vmatpush1.bf16.msra.mxu0 0
        %542 = vmatprep.subr.bf16.mxu0 0
        %543 = vmatpush1.bf16.msra.mxu0 0
        %544 = vmatprep.mubr.bf16.mxu0 0
        %545 = vmatmul.mubr.bf16.gmra.mrb[0].mxu0 %v500
        %v546 = vpop.f32.mrb[0].mxu0
        %v547 = vadd.f32 %v426, %v546
        %v548 = vpop.f32.mrb[0].mxu0
        %v549 = vadd.f32 %v426, %v548
        %v550 = vpop.f32.mrb[0].mxu0
        %v551 = vadd.f32 %v431, %v550
        %v552 = vpop.f32.mrb[0].mxu0
        %v553 = vadd.f32 %v431, %v552
        %554 = vmatprep.mubr.bf16.mxu0 0
        %555 = vmatmul.mubr.bf16.gmra.mrb[0].mxu0 %v503
        %v556 = vpop.f32.mrb[0].mxu0
        %v557 = vadd.f32 %v436, %v556
        %v558 = vpop.f32.mrb[0].mxu0
        %v559 = vadd.f32 %v436, %v558
        %v560 = vpop.f32.mrb[0].mxu0
        %v561 = vadd.f32 %v441, %v560
        %v562 = vpop.f32.mrb[0].mxu0
        %v563 = vadd.f32 %v441, %v562
        %564 = vdwg.mxu0
        %vm565 = vcmp.ge.f32.partialorder %v547, 0.0
        %vm566 = vcmp.ge.f32.partialorder %v549, 0.0
        %vm567 = vcmp.ge.f32.partialorder %v551, 0.0
        %vm568 = vcmp.ge.f32.partialorder %v553, 0.0
        %vm569 = vcmp.ge.f32.partialorder %v557, 0.0
        %vm570 = vcmp.ge.f32.partialorder %v559, 0.0
        %vm571 = vcmp.ge.f32.partialorder %v561, 0.0
        %vm572 = vcmp.ge.f32.partialorder %v563, 0.0
        %v573 = vmul.f32 %v547, 0.1
        %v574 = vmul.f32 %v549, 0.1
        %v575 = vmul.f32 %v551, 0.1
        %v576 = vmul.f32 %v553, 0.1
        %v577 = vmul.f32 %v557, 0.1
        %v578 = vmul.f32 %v559, 0.1
        %v579 = vmul.f32 %v561, 0.1
        %v580 = vmul.f32 %v563, 0.1
        %v581 = vsel %vm565, %v547, %v573
        %v582 = vsel %vm566, %v549, %v574
        %v583 = vsel %vm567, %v551, %v575
        %v584 = vsel %vm568, %v553, %v576
        %v585 = vsel %vm569, %v557, %v577
        %v586 = vsel %vm570, %v559, %v578
        %v587 = vsel %vm571, %v561, %v579
        %v588 = vsel %vm572, %v563, %v580
        %589 = vst [vmem:[%s178] sm:$0xff] %v581
        %590 = vst [vmem:[%s178 + $0x8] sm:$0xff] %v582
        %591 = vst [vmem:[%s178 + $0x10] sm:$0xff] %v583
        %592 = vst [vmem:[%s178 + $0x18] sm:$0xff] %v584
        %593 = vst [vmem:[%s178 + $0x20] sm:$0xff] %v585
        %594 = vst [vmem:[%s178 + $0x28] sm:$0xff] %v586
        %595 = vst [vmem:[%s178 + $0x30] sm:$0xff] %v587
        %596 = vst [vmem:[%s178 + $0x38] sm:$0xff] %v588
        %s597 = sand.u32 %s94, 1
        %s598 = scalar_lea.sflag [#allocation6], %s597
        %s599 = sand.u32 %s94, 1
        %s600 = smul.addr %s599, 64
        %s601 = scalar_lea.vmem [#allocation7], %s600
        // Predicated region
        $region37: #{tpu_custom_call.1} parent=31 // pred_check
          %p602 = pneg %p104
        $region38: #{tpu_custom_call.1} parent=31 // pred_check_branch
          %604 = sbr.rel (%p602) target = $region40
        $region39: #{tpu_custom_call.1} parent=31 // pred_region
          %s606 = ssub.s32 1024, 1024
          %607 = vsyncadd %s598, %s606
          %s608 = smul.addr %s18, 8
          %s609 = smul.addr %s608, 128
          %s610 = scalar_lea.hbm %s3, %s609
          %s611 = sshll.u32 %s601, 4
          %s612 = int_to_ptr.vmem [resolvable:$true] %s611
          %617 = dma.vmem_to_hbm [thread:$0]  %s612, 1024, %s610, %s598, 256, 256, 16
        $region40: #{tpu_custom_call.1} parent=31 // pred_fallthru
          _
      $region32: #{tpu_custom_call.1} parent=5 // pred_fallthru
        _
      %p618 = scmp.le.s32.totalorder 2, %s13
      // Predicated region
      $region41: #{tpu_custom_call.1} parent=5 // pred_check
        %p619 = pneg %p618
      $region42: #{tpu_custom_call.1} parent=5 // pred_check_branch
        %621 = sbr.rel (%p619) target = $region44
      $region43: #{tpu_custom_call.1} parent=5 // pred_region
        %s622 = ssub.s32 %s13, 2
        // Predicated region
        $region45: #{tpu_custom_call.1} parent=43 // pred_check
          %p623 = pneg %p110
        $region46: #{tpu_custom_call.1} parent=43 // pred_check_branch
          %625 = sbr.rel (%p623) target = $region48
        $region47: #{tpu_custom_call.1} parent=43 // pred_region
          %s626 = sand.u32 %s95, 1
          %s627 = scalar_lea.sflag [#allocation6], %s626
          %s628 = sand.u32 %s95, 1
          %s629 = smul.addr %s628, 64
          %s630 = scalar_lea.vmem [#allocation7], %s629
          %631 = dma.done %s627, 1024
        $region48: #{tpu_custom_call.1} parent=43 // pred_fallthru
          _
      $region44: #{tpu_custom_call.1} parent=5 // pred_fallthru
        _
    $region6: #{tpu_custom_call.1} parent=1 // loop_footer
      %s17 = sadd.s32 1, %s13
    $region7: #{tpu_custom_call.1} parent=1 // loop_footer_branch
      %12 = sbr.rel target = $region3
    $region8: #{tpu_custom_call.1} parent=1 // loop_exit
      _
    %632 = vsyncpa [#allocation5], 1
    %s633 = scalar_lea.sflag [#allocation5], 1
    %634 = vsyncpa %s633, 1
    %635 = vsyncpa [#allocation6], 1
    %s636 = scalar_lea.sflag [#allocation6], 1
    %637 = vsyncpa %s636, 1

</llo_original>
